<compile_context>
chip_gen: v5e
topology: v5e:2x2
jax: 0.10.0
libtpu: 0.0.40
codegen_flags: <defaults>
</compile_context>

<pallas_src>
import numpy as np
import jax
import jax.numpy as jnp
from jax import lax
from jax.experimental import pallas as pl
from jax.experimental.pallas import tpu as pltpu

# ----------------------------- hyperparameters ------------------------------
START_DIM = 16   # start_dim  (Conv1d kernel_size of enc_conv1)
AE1       = 8    # ae_layer1
AE2       = 8    # ae_layer2
LATENT    = 8    # latent_dim  (must equal AE1 for dec_lin1(x) to be valid)
BL1       = 8    # branch_layer1
BL2       = 8    # branch_layer2
END_DIM   = 4    # end_dim
BATCH     = 8    # must be even (x.view(-1, 2, latent_dim) pairs rows)
LANES     = 128  # lane width of the packed weight slab and packed output

assert LATENT == AE1, "original forward applies dec_lin1 (in=ae_layer1) to latent vectors"
assert BATCH % 2 == 0

_VMEM = pl.BlockSpec(memory_space=pltpu.MemorySpace.VMEM)

# ----------------------- packed weight slab layout ---------------------------
# Each layer occupies an 8-row-aligned block: rows [off, off+k_in) hold the
# pre-transposed weight (k_in, n_out) in lanes [0, n_out); row off+k_in holds
# the bias in lanes [0, n_out).
_LAYERS = (
    ("enc_conv1",  START_DIM, AE1),       # Conv1d(1, AE1, kernel_size=START_DIM)
    ("enc_conv2",  AE1,       AE2),       # Conv1d(AE1, AE2, kernel_size=1)
    ("enc_lin1",   AE2,       LATENT),    # Linear(AE2, LATENT)
    ("dec_lin1",   AE1,       START_DIM), # Linear(AE1, START_DIM), applied to z
    ("bran_conv1", LATENT,    BL1),       # Conv1d(1, BL1, kernel_size=LATENT)
    ("bran_conv2", BL1,       BL2),       # Conv1d(BL1, BL2, kernel_size=1)
    ("bran_lin1",  BL2,       END_DIM),   # Linear(BL2, END_DIM)
)

_ROW_OFF = {}
_SLAB_ROWS = 0
for _name, _k_in, _n_out in _LAYERS:
    _ROW_OFF[_name] = _SLAB_ROWS
    _SLAB_ROWS += ((_k_in + 1 + 7) // 8) * 8   # weight rows + bias row, 8-aligned


def prepare_params(params):
    """One-time packing of all weights/biases into a lane-dense f32 slab.

    Hoisted out of the forward pass: no per-call transposes, and the whole
    parameter set reaches VMEM in a single DMA (60 KiB).
    """
    slab = jnp.zeros((_SLAB_ROWS, LANES), jnp.float32)
    for name, k_in, n_out in _LAYERS:
        w = params[name + "_w"].astype(jnp.float32)
        b = params[name + "_b"].astype(jnp.float32)
        wt = w.reshape(w.shape[0], -1).T          # (k_in, n_out): works for Conv1d & Linear
        assert wt.shape == (k_in, n_out), (name, wt.shape)
        off = _ROW_OFF[name]
        slab = slab.at[off:off + k_in, :n_out].set(wt)
        slab = slab.at[off + k_in, :n_out].set(b)
    return slab


# ------------------------------- fused kernel --------------------------------
def _calico_fused_kernel(x_ref, eps_ref, w_ref, out_ref):
    """Full ConvCalico forward on one batch tile.

    x:   (B, START_DIM)      eps: (B2, LATENT)      w: (_SLAB_ROWS, 128)
    out: (B, 128) packed = [recon | ls | preds | zeros] along lanes.
    """
    B = x_ref.shape[0]
    B2 = eps_ref.shape[0]

    def dense(h, name, k_in, n_out):
        off = _ROW_OFF[name]
        w = w_ref[off:off + k_in, 0:n_out]                      # (k_in, n_out) static slice
        b = w_ref[off + k_in:off + k_in + 1, 0:n_out]           # (1, n_out)
        return jnp.dot(h, w, preferred_element_type=jnp.float32) + b

    x = x_ref[...]                                               # (B, START_DIM)

    # encoder: enc_conv1 -> enc_conv2 -> enc_lin1 (full-window convs == matmuls)
    h1 = jnp.maximum(dense(x,  "enc_conv1", START_DIM, AE1), 0.0)
    h2 = jnp.maximum(dense(h1, "enc_conv2", AE1,       AE2), 0.0)
    z  = dense(h2, "enc_lin1", AE2, LATENT)                      # (B, LATENT)

    # recon = sigmoid(dec_lin1(z)) row-wise on the pre-reparameterization z
    recon = jax.nn.sigmoid(dense(z, "dec_lin1", AE1, START_DIM)) # (B, START_DIM)

    # mu / log_var de-interleave: torch's x.view(-1, 2, latent_dim) pairs
    # consecutive rows (even rows -> mu, odd rows -> log_var).  Done with tiny
    # 0/1 selection matmuls so it stays on the MXU (no strided sublane gather).
    # The 0.5 of reparameterize's exp(log_var / 2) is folded into the odd-row
    # selector, so the scale comes out of the MXU for free.
    r = lax.broadcasted_iota(jnp.int32, (B2, B), 0)
    c = lax.broadcasted_iota(jnp.int32, (B2, B), 1)
    sel_mu      = jnp.where(c == 2 * r, 1.0, 0.0).astype(jnp.float32)
    sel_lv_half = jnp.where(c == 2 * r + 1, 0.5, 0.0).astype(jnp.float32)
    mu           = jnp.dot(sel_mu,      z, preferred_element_type=jnp.float32)  # (B2, LATENT)
    log_var_half = jnp.dot(sel_lv_half, z, preferred_element_type=jnp.float32)  # (B2, LATENT)

    # reparameterize: ls = mu + eps * exp(log_var / 2)   (exp -> EUP slot)
    ls = mu + eps_ref[...] * jnp.exp(log_var_half)               # (B2, LATENT)

    # branch head: bran_conv1 -> bran_conv2 -> bran_lin1 -> sigmoid
    p1 = jnp.maximum(dense(ls, "bran_conv1", LATENT, BL1), 0.0)
    p2 = jnp.maximum(dense(p1, "bran_conv2", BL1,    BL2), 0.0)
    preds = jax.nn.sigmoid(dense(p2, "bran_lin1", BL2, END_DIM)) # (B2, END_DIM)

    # pack all outputs into one lane-dense (B, 128) value -> single unmasked store
    lp = jnp.concatenate([ls, preds], axis=1)                     # (B2, LATENT+END_DIM)
    lp = jnp.concatenate(
        [lp, jnp.zeros((B - B2, LATENT + END_DIM), jnp.float32)], axis=0)
    tail = jnp.zeros((B, LANES - (START_DIM + LATENT + END_DIM)), jnp.float32)
    out_ref[...] = jnp.concatenate([recon, lp, tail], axis=1)     # (B, 128)


# --------------------------------- wrapper ------------------------------------
@jax.jit
def conv_calico_forward(x_ncl, weight_slab, eps):
    """x_ncl: (B, 1, START_DIM) f32 (torch NCL layout). Returns (ls, recon, preds)."""
    B = x_ncl.shape[0]
    B2 = B // 2
    assert B % 2 == 0 and eps.shape == (B2, LATENT)
    x = x_ncl.reshape(B, START_DIM).astype(jnp.float32)

    # NOTE: at BATCH=8 this is a single-program, launch-latency-bound kernel.
    # If BATCH is scaled up, add a batch grid (blocks of 256-512 rows, weight
    # index_map -> (0, 0), dimension_semantics=("parallel",) so v7x's two
    # TensorCores each take half the batch) and feed bf16 operands to the MXU.
    packed = pl.pallas_call(
        _calico_fused_kernel,
        out_shape=jax.ShapeDtypeStruct((B, LANES), jnp.float32),
        in_specs=[_VMEM, _VMEM, _VMEM],
        out_specs=_VMEM,
    )(x, eps.astype(jnp.float32), weight_slab)

    recon = packed[:, :START_DIM].reshape(B2, 2, START_DIM)
    ls    = packed[:B2, START_DIM:START_DIM + LATENT]
    preds = packed[:B2, START_DIM + LATENT:START_DIM + LATENT + END_DIM]
    return ls, recon, preds


# ----------------------------- pure-JAX reference -----------------------------
def _reference_forward(x_ncl, params, eps):
    B = x_ncl.shape[0]
    B2 = B // 2
    x = x_ncl.reshape(B, START_DIM).astype(jnp.float32)

    def lin(h, name):
        w = params[name + "_w"].astype(jnp.float32)
        b = params[name + "_b"].astype(jnp.float32)
        return h @ w.reshape(w.shape[0], -1).T + b

    h1 = jax.nn.relu(lin(x, "enc_conv1"))
    h2 = jax.nn.relu(lin(h1, "enc_conv2"))
    z = lin(h2, "enc_lin1")
    recon = jax.nn.sigmoid(lin(z, "dec_lin1")).reshape(B2, 2, START_DIM)
    mu, log_var = z[0::2], z[1::2]
    ls = mu + eps * jnp.exp(log_var * 0.5)
    p1 = jax.nn.relu(lin(ls, "bran_conv1"))
    p2 = jax.nn.relu(lin(p1, "bran_conv2"))
    preds = jax.nn.sigmoid(lin(p2, "bran_lin1"))
    return ls, recon, preds


# --------------------------- deterministic init -------------------------------
def init_params(key):
    """PyTorch-style U(-1/sqrt(fan_in), 1/sqrt(fan_in)) init, deterministic."""
    ks = jax.random.split(key, 14)

    def u(k, shape, fan_in):
        bound = 1.0 / np.sqrt(fan_in)
        return jax.random.uniform(k, shape, jnp.float32, -bound, bound)

    return {
        # torch parameter shapes
        "enc_conv1_w": u(ks[0], (AE1, 1, START_DIM), START_DIM),
        "enc_conv1_b": u(ks[1], (AE1,), START_DIM),
        "enc_conv2_w": u(ks[2], (AE2, AE1, 1), AE1),
        "enc_conv2_b": u(ks[3], (AE2,), AE1),
        "enc_lin1_w":  u(ks[4], (LATENT, AE2), AE2),
        "enc_lin1_b":  u(ks[5], (LATENT,), AE2),
        "dec_lin1_w":  u(ks[6], (START_DIM, AE1), AE1),
        "dec_lin1_b":  u(ks[7], (START_DIM,), AE1),
        "bran_conv1_w": u(ks[8], (BL1, 1, LATENT), LATENT),
        "bran_conv1_b": u(ks[9], (BL1,), LATENT),
        "bran_conv2_w": u(ks[10], (BL2, BL1, 1), BL1),
        "bran_conv2_b": u(ks[11], (BL2,), BL1),
        "bran_lin1_w":  u(ks[12], (END_DIM, BL2), BL2),
        "bran_lin1_b":  u(ks[13], (END_DIM,), BL2),
        # dec_conv1 / dec_conv2 params exist in the module but never affect outputs.
    }


if __name__ == "__main__":
    key = jax.random.PRNGKey(0)
    k_params, k_x, k_eps = jax.random.split(key, 3)

    params = init_params(k_params)
    weight_slab = prepare_params(params)                 # one-time packing
    x = jax.random.normal(k_x, (BATCH, 1, START_DIM), dtype=jnp.float32)
    eps = jax.random.normal(k_eps, (BATCH // 2, LATENT), dtype=jnp.float32)

    ls, recon, preds = conv_calico_forward(x, weight_slab, eps)
    jax.block_until_ready((ls, recon, preds))

    assert ls.shape == (BATCH // 2, LATENT)
    assert recon.shape == (BATCH // 2, 2, START_DIM)
    assert preds.shape == (BATCH // 2, END_DIM)

    # correctness vs. pure-JAX reference (tolerance absorbs MXU bf16-pass matmul)
    ls_r, recon_r, preds_r = _reference_forward(x, params, eps)
    np.testing.assert_allclose(np.asarray(ls), np.asarray(ls_r), rtol=2e-2, atol=2e-2)
    np.testing.assert_allclose(np.asarray(recon), np.asarray(recon_r), rtol=2e-2, atol=2e-2)
    np.testing.assert_allclose(np.asarray(preds), np.asarray(preds_r), rtol=2e-2, atol=2e-2)

    print("KERNEL_OK")
</pallas_src>

<mosaic_0001>
module attributes {stable_mosaic.version = 11 : i64} {
  func.func @_calico_fused_kernel(%arg0: memref<8x16xf32, #tpu.memory_space<vmem>>, %arg1: memref<4x8xf32, #tpu.memory_space<vmem>>, %arg2: memref<120x128xf32, #tpu.memory_space<vmem>>, %arg3: memref<8x128xf32, #tpu.memory_space<vmem>>) attributes {dimension_semantics = [], scalar_prefetch = 0 : i64, scratch_operands = 0 : i64, tpu.core_type = #tpu.core_type<tc>} {
    %c0 = arith.constant 0 : index
    %c0_0 = arith.constant 0 : index
    %0 = vector.load %arg0[%c0, %c0_0] : memref<8x16xf32, #tpu.memory_space<vmem>>, vector<8x16xf32>
    %c0_1 = arith.constant 0 : index
    %c0_2 = arith.constant 0 : index
    %1 = vector.load %arg2[%c0_1, %c0_2] : memref<120x128xf32, #tpu.memory_space<vmem>>, vector<16x8xf32>
    %c16 = arith.constant 16 : index
    %c0_3 = arith.constant 0 : index
    %2 = vector.load %arg2[%c16, %c0_3] : memref<120x128xf32, #tpu.memory_space<vmem>>, vector<1x8xf32>
    %cst = arith.constant dense<0.000000e+00> : vector<8x8xf32>
    %3 = tpu.matmul %0, %1, %cst {dimension_numbers = #tpu.dot_dimension_numbers<[1], [0], [0], [1], [0, 0, 1, 1], [], []>} : vector<8x16xf32>, vector<16x8xf32>, vector<8x8xf32> -> vector<8x8xf32>
    %4 = vector.broadcast %2 : vector<1x8xf32> to vector<8x8xf32>
    %5 = arith.addf %3, %4 : vector<8x8xf32>
    %cst_4 = arith.constant 0.000000e+00 : f32
    %6 = vector.broadcast %cst_4 : f32 to vector<8x8xf32>
    %7 = arith.maximumf %5, %6 : vector<8x8xf32>
    %c24 = arith.constant 24 : index
    %c0_5 = arith.constant 0 : index
    %8 = vector.load %arg2[%c24, %c0_5] : memref<120x128xf32, #tpu.memory_space<vmem>>, vector<8x8xf32>
    %c32 = arith.constant 32 : index
    %c0_6 = arith.constant 0 : index
    %9 = vector.load %arg2[%c32, %c0_6] : memref<120x128xf32, #tpu.memory_space<vmem>>, vector<1x8xf32>
    %cst_7 = arith.constant dense<0.000000e+00> : vector<8x8xf32>
    %10 = tpu.matmul %7, %8, %cst_7 {dimension_numbers = #tpu.dot_dimension_numbers<[1], [0], [0], [1], [0, 0, 1, 1], [], []>} : vector<8x8xf32>, vector<8x8xf32>, vector<8x8xf32> -> vector<8x8xf32>
    %11 = vector.broadcast %9 : vector<1x8xf32> to vector<8x8xf32>
    %12 = arith.addf %10, %11 : vector<8x8xf32>
    %cst_8 = arith.constant 0.000000e+00 : f32
    %13 = vector.broadcast %cst_8 : f32 to vector<8x8xf32>
    %14 = arith.maximumf %12, %13 : vector<8x8xf32>
    %c40 = arith.constant 40 : index
    %c0_9 = arith.constant 0 : index
    %15 = vector.load %arg2[%c40, %c0_9] : memref<120x128xf32, #tpu.memory_space<vmem>>, vector<8x8xf32>
    %c48 = arith.constant 48 : index
    %c0_10 = arith.constant 0 : index
    %16 = vector.load %arg2[%c48, %c0_10] : memref<120x128xf32, #tpu.memory_space<vmem>>, vector<1x8xf32>
    %cst_11 = arith.constant dense<0.000000e+00> : vector<8x8xf32>
    %17 = tpu.matmul %14, %15, %cst_11 {dimension_numbers = #tpu.dot_dimension_numbers<[1], [0], [0], [1], [0, 0, 1, 1], [], []>} : vector<8x8xf32>, vector<8x8xf32>, vector<8x8xf32> -> vector<8x8xf32>
    %18 = vector.broadcast %16 : vector<1x8xf32> to vector<8x8xf32>
    %19 = arith.addf %17, %18 : vector<8x8xf32>
    %c56 = arith.constant 56 : index
    %c0_12 = arith.constant 0 : index
    %20 = vector.load %arg2[%c56, %c0_12] : memref<120x128xf32, #tpu.memory_space<vmem>>, vector<8x16xf32>
    %c64 = arith.constant 64 : index
    %c0_13 = arith.constant 0 : index
    %21 = vector.load %arg2[%c64, %c0_13] : memref<120x128xf32, #tpu.memory_space<vmem>>, vector<1x16xf32>
    %cst_14 = arith.constant dense<0.000000e+00> : vector<8x16xf32>
    %22 = tpu.matmul %19, %20, %cst_14 {dimension_numbers = #tpu.dot_dimension_numbers<[1], [0], [0], [1], [0, 0, 1, 1], [], []>} : vector<8x8xf32>, vector<8x16xf32>, vector<8x16xf32> -> vector<8x16xf32>
    %23 = vector.broadcast %21 : vector<1x16xf32> to vector<8x16xf32>
    %24 = arith.addf %22, %23 : vector<8x16xf32>
    %25 = arith.negf %24 : vector<8x16xf32>
    %26 = math.exp %25 : vector<8x16xf32>
    %cst_15 = arith.constant 1.000000e+00 : f32
    %27 = vector.broadcast %cst_15 : f32 to vector<8x16xf32>
    %28 = arith.addf %27, %26 : vector<8x16xf32>
    %29 = arith.divf %27, %28 : vector<8x16xf32>
    %30 = tpu.iota {dimensions = array<i32: 0>} : vector<4x8xi32>
    %31 = tpu.iota {dimensions = array<i32: 1>} : vector<4x8xi32>
    %c2_i32 = arith.constant 2 : i32
    %32 = vector.broadcast %c2_i32 : i32 to vector<4x8xi32>
    %33 = arith.muli %32, %30 : vector<4x8xi32>
    %34 = arith.cmpi eq, %31, %33 : vector<4x8xi32>
    %cst_16 = arith.constant 1.000000e+00 : f32
    %cst_17 = arith.constant 0.000000e+00 : f32
    %35 = vector.broadcast %cst_16 : f32 to vector<4x8xf32>
    %36 = vector.broadcast %cst_17 : f32 to vector<4x8xf32>
    %37 = arith.select %34, %35, %36 : vector<4x8xi1>, vector<4x8xf32>
    %c2_i32_18 = arith.constant 2 : i32
    %38 = vector.broadcast %c2_i32_18 : i32 to vector<4x8xi32>
    %39 = arith.muli %38, %30 : vector<4x8xi32>
    %c1_i32 = arith.constant 1 : i32
    %40 = vector.broadcast %c1_i32 : i32 to vector<4x8xi32>
    %41 = arith.addi %39, %40 : vector<4x8xi32>
    %42 = arith.cmpi eq, %31, %41 : vector<4x8xi32>
    %cst_19 = arith.constant 5.000000e-01 : f32
    %cst_20 = arith.constant 0.000000e+00 : f32
    %43 = vector.broadcast %cst_19 : f32 to vector<4x8xf32>
    %44 = vector.broadcast %cst_20 : f32 to vector<4x8xf32>
    %45 = arith.select %42, %43, %44 : vector<4x8xi1>, vector<4x8xf32>
    %cst_21 = arith.constant dense<0.000000e+00> : vector<4x8xf32>
    %46 = tpu.matmul %37, %19, %cst_21 {dimension_numbers = #tpu.dot_dimension_numbers<[1], [0], [0], [1], [0, 0, 1, 1], [], []>} : vector<4x8xf32>, vector<8x8xf32>, vector<4x8xf32> -> vector<4x8xf32>
    %cst_22 = arith.constant dense<0.000000e+00> : vector<4x8xf32>
    %47 = tpu.matmul %45, %19, %cst_22 {dimension_numbers = #tpu.dot_dimension_numbers<[1], [0], [0], [1], [0, 0, 1, 1], [], []>} : vector<4x8xf32>, vector<8x8xf32>, vector<4x8xf32> -> vector<4x8xf32>
    %c0_23 = arith.constant 0 : index
    %c0_24 = arith.constant 0 : index
    %48 = vector.load %arg1[%c0_23, %c0_24] : memref<4x8xf32, #tpu.memory_space<vmem>>, vector<4x8xf32>
    %49 = math.exp %47 : vector<4x8xf32>
    %50 = arith.mulf %48, %49 : vector<4x8xf32>
    %51 = arith.addf %46, %50 : vector<4x8xf32>
    %c72 = arith.constant 72 : index
    %c0_25 = arith.constant 0 : index
    %52 = vector.load %arg2[%c72, %c0_25] : memref<120x128xf32, #tpu.memory_space<vmem>>, vector<8x8xf32>
    %c80 = arith.constant 80 : index
    %c0_26 = arith.constant 0 : index
    %53 = vector.load %arg2[%c80, %c0_26] : memref<120x128xf32, #tpu.memory_space<vmem>>, vector<1x8xf32>
    %cst_27 = arith.constant dense<0.000000e+00> : vector<4x8xf32>
    %54 = tpu.matmul %51, %52, %cst_27 {dimension_numbers = #tpu.dot_dimension_numbers<[1], [0], [0], [1], [0, 0, 1, 1], [], []>} : vector<4x8xf32>, vector<8x8xf32>, vector<4x8xf32> -> vector<4x8xf32>
    %55 = vector.broadcast %53 : vector<1x8xf32> to vector<4x8xf32>
    %56 = arith.addf %54, %55 : vector<4x8xf32>
    %cst_28 = arith.constant 0.000000e+00 : f32
    %57 = vector.broadcast %cst_28 : f32 to vector<4x8xf32>
    %58 = arith.maximumf %56, %57 : vector<4x8xf32>
    %c88 = arith.constant 88 : index
    %c0_29 = arith.constant 0 : index
    %59 = vector.load %arg2[%c88, %c0_29] : memref<120x128xf32, #tpu.memory_space<vmem>>, vector<8x8xf32>
    %c96 = arith.constant 96 : index
    %c0_30 = arith.constant 0 : index
    %60 = vector.load %arg2[%c96, %c0_30] : memref<120x128xf32, #tpu.memory_space<vmem>>, vector<1x8xf32>
    %cst_31 = arith.constant dense<0.000000e+00> : vector<4x8xf32>
    %61 = tpu.matmul %58, %59, %cst_31 {dimension_numbers = #tpu.dot_dimension_numbers<[1], [0], [0], [1], [0, 0, 1, 1], [], []>} : vector<4x8xf32>, vector<8x8xf32>, vector<4x8xf32> -> vector<4x8xf32>
    %62 = vector.broadcast %60 : vector<1x8xf32> to vector<4x8xf32>
    %63 = arith.addf %61, %62 : vector<4x8xf32>
    %cst_32 = arith.constant 0.000000e+00 : f32
    %64 = vector.broadcast %cst_32 : f32 to vector<4x8xf32>
    %65 = arith.maximumf %63, %64 : vector<4x8xf32>
    %c104 = arith.constant 104 : index
    %c0_33 = arith.constant 0 : index
    %66 = vector.load %arg2[%c104, %c0_33] : memref<120x128xf32, #tpu.memory_space<vmem>>, vector<8x4xf32>
    %c112 = arith.constant 112 : index
    %c0_34 = arith.constant 0 : index
    %67 = vector.load %arg2[%c112, %c0_34] : memref<120x128xf32, #tpu.memory_space<vmem>>, vector<1x4xf32>
    %cst_35 = arith.constant dense<0.000000e+00> : vector<4x4xf32>
    %68 = tpu.matmul %65, %66, %cst_35 {dimension_numbers = #tpu.dot_dimension_numbers<[1], [0], [0], [1], [0, 0, 1, 1], [], []>} : vector<4x8xf32>, vector<8x4xf32>, vector<4x4xf32> -> vector<4x4xf32>
    %69 = vector.broadcast %67 : vector<1x4xf32> to vector<4x4xf32>
    %70 = arith.addf %68, %69 : vector<4x4xf32>
    %71 = arith.negf %70 : vector<4x4xf32>
    %72 = math.exp %71 : vector<4x4xf32>
    %cst_36 = arith.constant 1.000000e+00 : f32
    %73 = vector.broadcast %cst_36 : f32 to vector<4x4xf32>
    %74 = arith.addf %73, %72 : vector<4x4xf32>
    %75 = arith.divf %73, %74 : vector<4x4xf32>
    %76 = tpu.concatenate %51, %75 in 1 : vector<4x8xf32>, vector<4x4xf32> -> vector<4x12xf32>
    %cst_37 = arith.constant 0.000000e+00 : f32
    %77 = vector.broadcast %cst_37 : f32 to vector<4x12xf32>
    %78 = tpu.concatenate %76, %77 in 0 : vector<4x12xf32>, vector<4x12xf32> -> vector<8x12xf32>
    %cst_38 = arith.constant 0.000000e+00 : f32
    %79 = vector.broadcast %cst_38 : f32 to vector<8x100xf32>
    %80 = tpu.concatenate %29, %78, %79 in 1 : vector<8x16xf32>, vector<8x12xf32>, vector<8x100xf32> -> vector<8x128xf32>
    %c0_39 = arith.constant 0 : index
    %c0_40 = arith.constant 0 : index
    %81 = vector.load %arg3[%c0_39, %c0_40] : memref<8x128xf32, #tpu.memory_space<vmem>>, vector<8x128xf32>
    tpu.vector_store %arg3[%c0_39, %c0_40], %80 {strides = array<i32>} : memref<8x128xf32, #tpu.memory_space<vmem>>, vector<8x128xf32>,
    return
  }
}

</mosaic_0001>

<llo_original>
// kernel: conv_calico_forward.1
$region0: #{conv_calico_forward.1}
  #allocation0 [shape = 'u32[]', space=smem, size = 0x4, offset = 0x4, fixed_abs, tag = 'smem constant byte address 0x4 - core index']
  #allocation1 [shape = 'u32[72,128]{1,0:T(1,128)}', space=vmem, size = 0x9000, scoped, tag = 'internal scratch']
  %s0 = inlined_call_operand.hbm [shape: f32[8,16], index: 0, kind: input, shape index: {}]
  %s1 = inlined_call_operand.hbm [shape: f32[4,8], index: 1, kind: input, shape index: {}]
  %s2 = inlined_call_operand.hbm [shape: f32[120,128], index: 2, kind: input, shape index: {}]
  %s3 = inlined_call_operand.vmem [shape: f32[8,128], index: 3, kind: output, shape index: {}]
  %s4 = sld [smem:[#allocation0]]
  $region34: #{conv_calico_forward.1} parent=0
    _
  %s6 = ssub.s32 1, %s4
  %s7 = scalar_select 0, %s6, %s4
  $region1: #{conv_calico_forward.1} parent=0
    #allocation2 [shape = 'u8[4096]{0}', space=vmem, size = 0x1000, scoped, tag = 'input window, operand 0, single buffered']
    #allocation3 [shape = 's32[1]{0}', space=sflag, size = 0x4, scoped, tag = 'scoped memory for conv_calico_forward.1']
    #allocation4 [shape = 'u8[2048]{0}', space=vmem, size = 0x800, scoped, tag = 'input window, operand 1, single buffered']
    #allocation5 [shape = 's32[1]{0}', space=sflag, size = 0x4, scoped, tag = 'scoped memory for conv_calico_forward.1']
    #allocation6 [shape = 'u8[61440]{0}', space=vmem, size = 0xf000, scoped, tag = 'input window, operand 2, single buffered']
    %8 = vsyncpa [#allocation3], 0
    %9 = vsyncpa [#allocation5], 0
    // Predicated region
    $region2: #{conv_calico_forward.1} parent=1 // pred_check
      _
    $region3: #{conv_calico_forward.1} parent=1 // pred_check_branch
      %11 = sbr.rel (0) target = $region5
    $region4: #{conv_calico_forward.1} parent=1 // pred_region
      %13 = vsyncadd [#allocation3], 0
      %s15 = sshll.u32 %s0, 4
      %s16 = int_to_ptr.hbm [resolvable:$true] %s15
      %s17 = sshll.u32 [#allocation2], 4
      %s18 = int_to_ptr.vmem [resolvable:$true] %s17
      %20 = dma.hbm_to_vmem [thread:$0]  %s16, 128, %s18, [#allocation3]
    $region5: #{conv_calico_forward.1} parent=1 // pred_fallthru
      _
    // Predicated region
    $region6: #{conv_calico_forward.1} parent=1 // pred_check
      _
    $region7: #{conv_calico_forward.1} parent=1 // pred_check_branch
      %22 = sbr.rel (0) target = $region9
    $region8: #{conv_calico_forward.1} parent=1 // pred_region
      %24 = vsyncadd [#allocation5], 0
      %s26 = sshll.u32 %s1, 4
      %s27 = int_to_ptr.hbm [resolvable:$true] %s26
      %s28 = sshll.u32 [#allocation4], 4
      %s29 = int_to_ptr.vmem [resolvable:$true] %s28
      %31 = dma.hbm_to_vmem [thread:$0]  %s27, 64, %s29, [#allocation5]
    $region9: #{conv_calico_forward.1} parent=1 // pred_fallthru
      _
    // Predicated region
    $region10: #{conv_calico_forward.1} parent=1 // pred_check
      _
    $region11: #{conv_calico_forward.1} parent=1 // pred_check_branch
      %33 = sbr.rel (0) target = $region13
    $region12: #{conv_calico_forward.1} parent=1 // pred_region
      %35 = vsyncadd [#allocation5], 0
      %s36 = sshll.u32 %s2, 4
      %s37 = int_to_ptr.hbm [resolvable:$true] %s36
      %s38 = sshll.u32 [#allocation6], 4
      %s39 = int_to_ptr.vmem [resolvable:$true] %s38
      %44 = dma.hbm_to_vmem [thread:$0]  %s37, 1920, %s39, [#allocation5], 128, 128, 8
    $region13: #{conv_calico_forward.1} parent=1 // pred_fallthru
      _
    // Predicated region
    $region14: #{conv_calico_forward.1} parent=1 // pred_check
      _
    $region15: #{conv_calico_forward.1} parent=1 // pred_check_branch
      %46 = sbr.rel (0) target = $region17
    $region16: #{conv_calico_forward.1} parent=1 // pred_region
      %48 = dma.done [#allocation3], 128
    $region17: #{conv_calico_forward.1} parent=1 // pred_fallthru
      _
    // Predicated region
    $region18: #{conv_calico_forward.1} parent=1 // pred_check
      _
    $region19: #{conv_calico_forward.1} parent=1 // pred_check_branch
      %50 = sbr.rel (0) target = $region21
    $region20: #{conv_calico_forward.1} parent=1 // pred_region
      %52 = dma.done [#allocation5], 64
    $region21: #{conv_calico_forward.1} parent=1 // pred_fallthru
      _
    // Predicated region
    $region22: #{conv_calico_forward.1} parent=1 // pred_check
      _
    $region23: #{conv_calico_forward.1} parent=1 // pred_check_branch
      %54 = sbr.rel (0) target = $region25
    $region24: #{conv_calico_forward.1} parent=1 // pred_region
      %56 = dma.done [#allocation5], 1920
    $region25: #{conv_calico_forward.1} parent=1 // pred_fallthru
      _
    %v57 = vld [vmem:[#allocation2] sm:$0xff]
    %v58 = vld [vmem:[#allocation6] sm:$0xff]
    %v59 = vld [vmem:[#allocation6 + $0x8] sm:$0xff]
    %v60 = vld [vmem:[#allocation6 + $0x10] sm:$0x1]
    %v61 = vperm.slane %v60, 0
    %vm62 = vcmask 130048
    %v64 = vsel %vm62, %v57, 0
    %66 = vmatpush.msra.mxu0 0.0
    %67 = vmatpush.msra.mxu0 0.0
    %68 = vmatpush.msra.mxu0 0.0
    %69 = vmatpush.msra.mxu0 0.0
    %70 = vmatpush.msra.mxu0 0.0
    %71 = vmatpush.msra.mxu0 0.0
    %72 = vmatpush.msra.mxu0 0.0
    %73 = vmatpush.msra.mxu0 0.0
    %74 = vmatpush.msra.mxu0 0.0
    %75 = vmatpush.msra.mxu0 0.0
    %76 = vmatpush.msra.mxu0 0.0
    %77 = vmatpush.msra.mxu0 0.0
    %78 = vmatpush.msra.mxu0 0.0
    %79 = vmatpush.msra.mxu0 0.0
    %80 = vmatpush.msra.mxu0 %v59
    %81 = vmatpush.msra.mxu0 %v58
    %82 = vmatmul.f32.gmra.mxu0 %v64
    %v83 = vpop.f32.mrf.mxu0
    %v84 = vadd.f32 %v61, %v83
    %85 = vdwg.mxu0
    %v86 = vmax.f32 %v84, 0.0
    %v87 = vld [vmem:[#allocation6 + $0x18] sm:$0xff]
    %v88 = vld [vmem:[#allocation6 + $0x20] sm:$0x1]
    %v89 = vperm.slane %v88, 0
    %vm90 = vcmask 64512
    %v92 = vsel %vm90, %v86, 0
    %94 = vmatpush.msra.mxu0 0.0
    %95 = vmatpush.msra.mxu0 0.0
    %96 = vmatpush.msra.mxu0 0.0
    %97 = vmatpush.msra.mxu0 0.0
    %98 = vmatpush.msra.mxu0 0.0
    %99 = vmatpush.msra.mxu0 0.0
    %100 = vmatpush.msra.mxu0 0.0
    %101 = vmatpush.msra.mxu0 0.0
    %102 = vmatpush.msra.mxu0 0.0
    %103 = vmatpush.msra.mxu0 0.0
    %104 = vmatpush.msra.mxu0 0.0
    %105 = vmatpush.msra.mxu0 0.0
    %106 = vmatpush.msra.mxu0 0.0
    %107 = vmatpush.msra.mxu0 0.0
    %108 = vmatpush.msra.mxu0 0.0
    %109 = vmatpush.msra.mxu0 %v87
    %110 = vmatmul.f32.gmra.mxu0 %v92
    %v111 = vpop.f32.mrf.mxu0
    %v112 = vadd.f32 %v89, %v111
    %113 = vdwg.mxu0
    %v114 = vmax.f32 %v112, 0.0
    %v115 = vld [vmem:[#allocation6 + $0x28] sm:$0xff]
    %v116 = vld [vmem:[#allocation6 + $0x30] sm:$0x1]
    %v117 = vperm.slane %v116, 0
    %v119 = vsel %vm90, %v114, 0
    %121 = vmatpush.msra.mxu0 0.0
    %122 = vmatpush.msra.mxu0 0.0
    %123 = vmatpush.msra.mxu0 0.0
    %124 = vmatpush.msra.mxu0 0.0
    %125 = vmatpush.msra.mxu0 0.0
    %126 = vmatpush.msra.mxu0 0.0
    %127 = vmatpush.msra.mxu0 0.0
    %128 = vmatpush.msra.mxu0 0.0
    %129 = vmatpush.msra.mxu0 0.0
    %130 = vmatpush.msra.mxu0 0.0
    %131 = vmatpush.msra.mxu0 0.0
    %132 = vmatpush.msra.mxu0 0.0
    %133 = vmatpush.msra.mxu0 0.0
    %134 = vmatpush.msra.mxu0 0.0
    %135 = vmatpush.msra.mxu0 0.0
    %136 = vmatpush.msra.mxu0 %v115
    %137 = vmatmul.f32.gmra.mxu0 %v119
    %v138 = vpop.f32.mrf.mxu0
    %v139 = vadd.f32 %v117, %v138
    %140 = vdwg.mxu0
    %v141 = vld [vmem:[#allocation6 + $0x38] sm:$0xff]
    %v142 = vld [vmem:[#allocation6 + $0x40] sm:$0x1]
    %v143 = vperm.slane %v142, 0
    %v145 = vsel %vm90, %v139, 0
    %147 = vmatpush.msra.mxu0 0.0
    %148 = vmatpush.msra.mxu0 0.0
    %149 = vmatpush.msra.mxu0 0.0
    %150 = vmatpush.msra.mxu0 0.0
    %151 = vmatpush.msra.mxu0 0.0
    %152 = vmatpush.msra.mxu0 0.0
    %153 = vmatpush.msra.mxu0 0.0
    %154 = vmatpush.msra.mxu0 0.0
    %155 = vmatpush.msra.mxu0 0.0
    %156 = vmatpush.msra.mxu0 0.0
    %157 = vmatpush.msra.mxu0 0.0
    %158 = vmatpush.msra.mxu0 0.0
    %159 = vmatpush.msra.mxu0 0.0
    %160 = vmatpush.msra.mxu0 0.0
    %161 = vmatpush.msra.mxu0 0.0
    %162 = vmatpush.msra.mxu0 %v141
    %163 = vmatmul.f32.gmra.mxu0 %v145
    %v164 = vpop.f32.mrf.mxu0
    %v165 = vadd.f32 %v143, %v164
    %166 = vdwg.mxu0
    %v167 = vxor.u32 %v165, 2147483648
    %v168 = vmul.f32 %v167, 1.442695
    %v169 = vpow.pop %v168
    %v170 = vadd.f32 %v169, 1.0
    %v171 = vrcp.pop %v170
    %v172 = vmul.f32 %v170, %v171
    %v173 = vsub.f32 1.0, %v172
    %v174 = vmul.f32 %v171, %v173
    %v175 = vadd.f32 %v171, %v174
    %vm176 = vweird.f32 %v170
    %vm177 = vweird.f32 %v171
    %vm178 = vmor %vm176, %vm177
    %v179 = vsel %vm178, %v171, %v175
    %v180 = vand.u32 2147483647, %v170
    %vm181 = vcmp.eq.f32.partialorder %v180, 8.507059e+37
    %v182 = vand.u32 %v170, 2147483648
    %v183 = vor.u32 1.1754944e-38, %v182
    %v184 = vsel %vm181, %v183, %v179
    %v185 = vmul.f32 1.0, %v184
    %v186 = vlaneseq
    %v187 = vshrl.u32 %v186, 7
    %v188 = vlaneseq
    %v189 = vand.u32 %v188, 127
    %v190 = vmul.u32 %v187, 2
    %vm191 = vcmp.eq.s32.totalorder %v189, %v190
    %v192 = vsel %vm191, 1.0, 0.0
    %v193 = vadd.s32 %v190, 1
    %vm194 = vcmp.eq.s32.totalorder %v189, %v193
    %v195 = vsel %vm194, 0.5, 0.0
    %v197 = vsel %vm90, %v195, 0
    %199 = vmatpush.msra.mxu0 0.0
    %200 = vmatpush.msra.mxu0 0.0
    %201 = vmatpush.msra.mxu0 0.0
    %202 = vmatpush.msra.mxu0 0.0
    %203 = vmatpush.msra.mxu0 0.0
    %204 = vmatpush.msra.mxu0 0.0
    %205 = vmatpush.msra.mxu0 0.0
    %206 = vmatpush.msra.mxu0 0.0
    %207 = vmatpush.msra.mxu0 0.0
    %208 = vmatpush.msra.mxu0 0.0
    %209 = vmatpush.msra.mxu0 0.0
    %210 = vmatpush.msra.mxu0 0.0
    %211 = vmatpush.msra.mxu0 0.0
    %212 = vmatpush.msra.mxu0 0.0
    %213 = vmatpush.msra.mxu0 0.0
    %214 = vmatpush.msra.mxu0 %v139
    %215 = vmatmul.f32.gmra.mxu0 %v197
    %v216 = vpop.f32.mrf.mxu0
    %v217 = vadd.f32 0.0, %v216
    %218 = vdwg.mxu0
    %v219 = vld [vmem:[#allocation4] sm:$0xf]
    %v220 = vmul.f32 %v217, 1.442695
    %v221 = vpow.pop %v220
    %v222 = vmul.f32 %v219, %v221
    %v224 = vsel %vm90, %v192, 0
    %226 = vmatpush.msra.mxu0 0.0
    %227 = vmatpush.msra.mxu0 0.0
    %228 = vmatpush.msra.mxu0 0.0
    %229 = vmatpush.msra.mxu0 0.0
    %230 = vmatpush.msra.mxu0 0.0
    %231 = vmatpush.msra.mxu0 0.0
    %232 = vmatpush.msra.mxu0 0.0
    %233 = vmatpush.msra.mxu0 0.0
    %234 = vmatpush.msra.mxu0 0.0
    %235 = vmatpush.msra.mxu0 0.0
    %236 = vmatpush.msra.mxu0 0.0
    %237 = vmatpush.msra.mxu0 0.0
    %238 = vmatpush.msra.mxu0 0.0
    %239 = vmatpush.msra.mxu0 0.0
    %240 = vmatpush.msra.mxu0 0.0
    %241 = vmatpush.msra.mxu0 %v139
    %242 = vmatmul.f32.gmra.mxu0 %v224
    %v243 = vpop.f32.mrf.mxu0
    %v244 = vadd.f32 %v222, %v243
    %245 = vdwg.mxu0
    %v246 = vld [vmem:[#allocation6 + $0x48] sm:$0xff]
    %v247 = vld [vmem:[#allocation6 + $0x50] sm:$0x1]
    %v248 = vperm.slane %v247, 0
    %v250 = vsel %vm90, %v244, 0
    %252 = vmatpush.msra.mxu0 0.0
    %253 = vmatpush.msra.mxu0 0.0
    %254 = vmatpush.msra.mxu0 0.0
    %255 = vmatpush.msra.mxu0 0.0
    %256 = vmatpush.msra.mxu0 0.0
    %257 = vmatpush.msra.mxu0 0.0
    %258 = vmatpush.msra.mxu0 0.0
    %259 = vmatpush.msra.mxu0 0.0
    %260 = vmatpush.msra.mxu0 0.0
    %261 = vmatpush.msra.mxu0 0.0
    %262 = vmatpush.msra.mxu0 0.0
    %263 = vmatpush.msra.mxu0 0.0
    %264 = vmatpush.msra.mxu0 0.0
    %265 = vmatpush.msra.mxu0 0.0
    %266 = vmatpush.msra.mxu0 0.0
    %267 = vmatpush.msra.mxu0 %v246
    %268 = vmatmul.f32.gmra.mxu0 %v250
    %v269 = vpop.f32.mrf.mxu0
    %v270 = vadd.f32 %v248, %v269
    %271 = vdwg.mxu0
    %v272 = vmax.f32 %v270, 0.0
    %v273 = vld [vmem:[#allocation6 + $0x58] sm:$0xff]
    %v274 = vld [vmem:[#allocation6 + $0x60] sm:$0x1]
    %v275 = vperm.slane %v274, 0
    %v277 = vsel %vm90, %v272, 0
    %279 = vmatpush.msra.mxu0 0.0
    %280 = vmatpush.msra.mxu0 0.0
    %281 = vmatpush.msra.mxu0 0.0
    %282 = vmatpush.msra.mxu0 0.0
    %283 = vmatpush.msra.mxu0 0.0
    %284 = vmatpush.msra.mxu0 0.0
    %285 = vmatpush.msra.mxu0 0.0
    %286 = vmatpush.msra.mxu0 0.0
    %287 = vmatpush.msra.mxu0 0.0
    %288 = vmatpush.msra.mxu0 0.0
    %289 = vmatpush.msra.mxu0 0.0
    %290 = vmatpush.msra.mxu0 0.0
    %291 = vmatpush.msra.mxu0 0.0
    %292 = vmatpush.msra.mxu0 0.0
    %293 = vmatpush.msra.mxu0 0.0
    %294 = vmatpush.msra.mxu0 %v273
    %295 = vmatmul.f32.gmra.mxu0 %v277
    %v296 = vpop.f32.mrf.mxu0
    %v297 = vadd.f32 %v275, %v296
    %298 = vdwg.mxu0
    %v299 = vmax.f32 %v297, 0.0
    %v300 = vld [vmem:[#allocation6 + $0x68] sm:$0xff]
    %v301 = vld [vmem:[#allocation6 + $0x70] sm:$0x1]
    %v302 = vperm.slane %v301, 0
    %v304 = vsel %vm90, %v299, 0
    %306 = vmatpush.msra.mxu0 0.0
    %307 = vmatpush.msra.mxu0 0.0
    %308 = vmatpush.msra.mxu0 0.0
    %309 = vmatpush.msra.mxu0 0.0
    %310 = vmatpush.msra.mxu0 0.0
    %311 = vmatpush.msra.mxu0 0.0
    %312 = vmatpush.msra.mxu0 0.0
    %313 = vmatpush.msra.mxu0 0.0
    %314 = vmatpush.msra.mxu0 0.0
    %315 = vmatpush.msra.mxu0 0.0
    %316 = vmatpush.msra.mxu0 0.0
    %317 = vmatpush.msra.mxu0 0.0
    %318 = vmatpush.msra.mxu0 0.0
    %319 = vmatpush.msra.mxu0 0.0
    %320 = vmatpush.msra.mxu0 0.0
    %321 = vmatpush.msra.mxu0 %v300
    %322 = vmatmul.f32.gmra.mxu0 %v304
    %v323 = vpop.f32.mrf.mxu0
    %v324 = vadd.f32 %v302, %v323
    %325 = vdwg.mxu0
    %v326 = vxor.u32 %v324, 2147483648
    %v327 = vmul.f32 %v326, 1.442695
    %v328 = vpow.pop %v327
    %v329 = vadd.f32 %v328, 1.0
    %v330 = vrcp.pop %v329
    %v331 = vmul.f32 %v329, %v330
    %v332 = vsub.f32 1.0, %v331
    %v333 = vmul.f32 %v330, %v332
    %v334 = vadd.f32 %v330, %v333
    %vm335 = vweird.f32 %v329
    %vm336 = vweird.f32 %v330
    %vm337 = vmor %vm335, %vm336
    %v338 = vsel %vm337, %v330, %v334
    %v339 = vand.u32 2147483647, %v329
    %vm340 = vcmp.eq.f32.partialorder %v339, 8.507059e+37
    %v341 = vand.u32 %v329, 2147483648
    %v342 = vor.u32 1.1754944e-38, %v341
    %v343 = vsel %vm340, %v342, %v338
    %v344 = vmul.f32 1.0, %v343
    %346 = vrot.lane.b32.xlu0 %v344, 8
    %v347 = vpop.permute.xlu0 %346
    %v349 = vsel %vm90, %v244, %v347
    %vm350 = vcmask 1043456
    %v351 = vsel %vm350, %v349, 0.0
    %353 = vrot.lane.b32.xlu0 %v351, 16
    %v354 = vpop.permute.xlu0 %353
    %v356 = vsel %vm62, %v185, %v354
    %vm357 = vcmask 228352
    %v358 = vsel %vm357, %v356, 0.0
    %359 = vst [vmem:[%s3] sm:$0xff] %v358
    // Predicated region
    $region26: #{conv_calico_forward.1} parent=1 // pred_check
      _
    $region27: #{conv_calico_forward.1} parent=1 // pred_check_branch
      %361 = sbr.rel (0) target = $region29
    $region28: #{conv_calico_forward.1} parent=1 // pred_region
      _
    $region29: #{conv_calico_forward.1} parent=1 // pred_fallthru
      _
    // Predicated region
    $region30: #{conv_calico_forward.1} parent=1 // pred_check
      _
    $region31: #{conv_calico_forward.1} parent=1 // pred_check_branch
      %363 = sbr.rel (0) target = $region33
    $region32: #{conv_calico_forward.1} parent=1 // pred_region
      _
    $region33: #{conv_calico_forward.1} parent=1 // pred_fallthru
      _
    %364 = vsyncpa [#allocation3], 1
    %365 = vsyncpa [#allocation5], 1

</llo_original>
